<compile_context>
chip_gen: v7x
topology: tpu7x:2x2x1
jax: 0.10.0
libtpu: 0.0.40
codegen_flags: <defaults>
</compile_context>

<pallas_src>
import math

import jax
import jax.numpy as jnp
import numpy as np
from jax import lax
from jax.experimental import pallas as pl
from jax.experimental.pallas import tpu as pltpu


def _cdiv(a, b):
    return -(-a // b)


def _round_up(x, m):
    return _cdiv(x, m) * m


def ec_pair_loss(anchor, anchor_label, negative, negative_label, class_statis):
    """anchor/negative: [B, ...]; labels: [B] int; class_statis: [NUM_CLASSES]."""
    B = anchor.shape[0]
    a = anchor.reshape(B, -1)
    n = negative.reshape(B, -1)
    # Promote non-floats; keep low-precision floats (bf16 -> half the HBM bytes),
    # and promote mixed dtypes instead of silently downcasting.
    if not jnp.issubdtype(a.dtype, jnp.floating):
        a = a.astype(jnp.float32)
    if not jnp.issubdtype(n.dtype, jnp.floating):
        n = n.astype(jnp.float32)
    common = jnp.promote_types(a.dtype, n.dtype)
    a = a.astype(common)
    n = n.astype(common)
    D = a.shape[1]

    # Per-row weight 1{la!=ln} / (cs[la]*cs[ln]) precomputed once (O(B) XLA work).
    la = anchor_label.reshape(-1).astype(jnp.int32)
    ln = negative_label.reshape(-1).astype(jnp.int32)
    cs = class_statis.reshape(-1).astype(jnp.float32)
    w = jnp.where(la != ln, 1.0 / (cs[la] * cs[ln]), 0.0).astype(jnp.float32)

    itemsize = jnp.dtype(common).itemsize
    row_align = max(8, 32 // itemsize)     # native sublane pack: 8 f32 / 16 bf16 / 32 i8

    # Feature chunking: use the full D when it fits one lane-dense tile
    # (a block dim equal to the full array dim is legal even if not a lane
    # multiple), otherwise 2048-lane chunks.
    td_target = 2048
    tD = D if D <= td_target else td_target

    # Row tile from a conservative VMEM budget (safe on v7x's 64 MiB VMEM):
    # 2 inputs x 2 pipeline buffers + f32 accumulator + f32 temporaries.
    tile_budget = 12 * 1024 * 1024
    bytes_per_elem = 4 * itemsize + 4 + 8
    tB = tile_budget // (bytes_per_elem * tD)
    tB = max(row_align, (tB // row_align) * row_align)
    tB = min(tB, 1024)

    nd = _cdiv(D, tD)
    # Guarantee a handful of grid steps (when the data allows) so the BlockSpec
    # pipeline can double-buffer instead of fully serializing DMA and compute.
    if _cdiv(B, tB) * nd < 4:
        want_nb = min(_cdiv(4, nd), _cdiv(B, row_align))
        tB = min(tB, _round_up(_cdiv(B, max(want_nb, 1)), row_align))
    if tB >= B:
        tB = B          # single row tile == full dim: always a legal block, no row mask
    nb = _cdiv(B, tB)

    need_row_mask = (B % tB) != 0
    need_col_mask = (D % tD) != 0

    # Only the tiny weight vector is padded (to exactly nb*tB rows, zeros beyond B).
    w = jnp.pad(w, (0, nb * tB - B)).reshape(nb * tB, 1)

    def kernel(a_ref, n_ref, w_ref, out_ref, acc_ref):
        j = pl.program_id(1)

        @pl.when(j == 0)
        def _init():
            acc_ref[...] = jnp.zeros_like(acc_ref)

        d = a_ref[...].astype(jnp.float32) - n_ref[...].astype(jnp.float32)
        if need_row_mask or need_col_mask:
            # Edge blocks contain garbage outside [B, D); mask before squaring
            # (do not rely on w == 0: NaN * 0 = NaN).
            valid = None
            if need_row_mask:
                rows = pl.program_id(0) * tB + lax.broadcasted_iota(
                    jnp.int32, (tB, tD), 0)
                valid = rows < B
            if need_col_mask:
                cols = j * tD + lax.broadcasted_iota(jnp.int32, (tB, tD), 1)
                cmask = cols < D
                valid = cmask if valid is None else jnp.logical_and(valid, cmask)
            d = jnp.where(valid, d, 0.0)

        # Streaming accumulation: pure VPU adds into a persistent f32 VMEM tile
        # (per-row weight broadcast along lanes); no per-step reduce, no SMEM hop.
        acc_ref[...] += w_ref[...] * (d * d)

        @pl.when(j == pl.num_programs(1) - 1)
        def _finalize():
            total = jnp.sum(acc_ref[...])             # one reduce per batch tile
            r = lax.broadcasted_iota(jnp.int32, (1, 8, 128), 1)
            c = lax.broadcasted_iota(jnp.int32, (1, 8, 128), 2)
            out_ref[...] = jnp.where((r == 0) & (c == 0), total, jnp.float32(0.0))

    partials = pl.pallas_call(
        kernel,
        out_shape=jax.ShapeDtypeStruct((nb, 8, 128), jnp.float32),
        grid=(nb, nd),
        in_specs=[
            pl.BlockSpec((tB, tD), lambda i, j: (i, j)),
            pl.BlockSpec((tB, tD), lambda i, j: (i, j)),
            pl.BlockSpec((tB, 1), lambda i, j: (i, 0)),
        ],
        out_specs=pl.BlockSpec((1, 8, 128), lambda i, j: (i, 0, 0)),
        scratch_shapes=[pltpu.VMEM((tB, tD), jnp.float32)],
        compiler_params=pltpu.CompilerParams(
            dimension_semantics=("parallel", "arbitrary"),  # megacore over batch tiles
            vmem_limit_bytes=32 * 1024 * 1024,              # safe on v7x (64 MiB VMEM)
        ),
    )(a, n, w)

    loss = jnp.sum(partials[:, 0, 0])
    return jnp.log1p(loss)


def _reference(anchor, anchor_label, negative, negative_label, class_statis):
    """Pure-numpy replica of the PyTorch forward (float64)."""
    a = np.asarray(anchor).astype(np.float64).reshape(anchor.shape[0], -1)
    n = np.asarray(negative).astype(np.float64).reshape(negative.shape[0], -1)
    la = np.asarray(anchor_label)
    ln = np.asarray(negative_label)
    cs = np.asarray(class_statis).astype(np.float64)
    loss = 0.0
    for i in range(a.shape[0]):
        if la[i] != ln[i]:
            wt = (1.0 / cs[la[i]]) * (1.0 / cs[ln[i]])
            loss += wt * np.sum(np.abs(a[i] - n[i]) ** 2)
    return math.log(1.0 + loss)


def _run_case(name, key, B, C, H, W, num_classes, dtype, rtol):
    k1, k2, k3, k4, k5 = jax.random.split(key, 5)
    anchor = jax.random.normal(k1, (B, C, H, W), dtype=jnp.float32).astype(dtype)
    negative = jax.random.normal(k2, (B, C, H, W), dtype=jnp.float32).astype(dtype)
    anchor_label = jax.random.randint(k3, (B,), 0, num_classes, dtype=jnp.int32)
    negative_label = jax.random.randint(k4, (B,), 0, num_classes, dtype=jnp.int32)
    class_statis = jax.random.uniform(
        k5, (num_classes,), jnp.float32, minval=5.0, maxval=20.0)

    loss = ec_pair_loss(anchor, anchor_label, negative, negative_label, class_statis)
    loss = jax.block_until_ready(loss)
    ref = _reference(anchor, anchor_label, negative, negative_label, class_statis)
    np.testing.assert_allclose(float(loss), ref, rtol=rtol, atol=1e-6,
                               err_msg=f"case {name}")


if __name__ == "__main__":
    root = jax.random.PRNGKey(0)
    keys = jax.random.split(root, 4)
    # 1) small aligned case: B=8, D=64 (full-dim blocks).
    _run_case("aligned_f32", keys[0], 8, 4, 4, 4, 5, jnp.float32, 1e-5)
    # 2) odd batch / odd feature width: B=6, D=105 (full-dim, non-128 lanes).
    _run_case("odd_f32", keys[1], 6, 3, 5, 7, 4, jnp.float32, 1e-5)
    # 3) D larger than one chunk: D=2560 -> two 2048-lane chunks + lane masking.
    _run_case("dchunk_f32", keys[2], 16, 10, 16, 16, 5, jnp.float32, 1e-5)
    # 4) bf16 streaming + row masking on the last batch tile (B=24, tB=16).
    _run_case("bf16_rows", keys[3], 24, 4, 4, 4, 5, jnp.bfloat16, 1e-4)
    print("KERNEL_OK")
</pallas_src>

<mosaic_0001>
module attributes {stable_mosaic.version = 11 : i64} {
  func.func @kernel(%arg0: i32, %arg1: i32, %arg2: memref<8x64xf32, #tpu.memory_space<vmem>>, %arg3: memref<8x64xf32, #tpu.memory_space<vmem>>, %arg4: memref<8x1xf32, #tpu.memory_space<vmem>>, %arg5: memref<1x8x128xf32, #tpu.memory_space<vmem>>, %arg6: memref<8x64xf32, #tpu.memory_space<vmem>>) attributes {dimension_semantics = [#tpu.dimension_semantics<parallel>, #tpu.dimension_semantics<arbitrary>], iteration_bounds = array<i64: 1, 1>, scalar_prefetch = 0 : i64, scratch_operands = 1 : i64, tpu.core_type = #tpu.core_type<tc>, window_params = [{transform_indices = @transform_0, window_bounds = array<i64: 8, 64>}, {transform_indices = @transform_1, window_bounds = array<i64: 8, 64>}, {transform_indices = @transform_2, window_bounds = array<i64: 8, 1>}, {transform_indices = @transform_3, window_bounds = array<i64: 1, 8, 128>}]} {
    %c0_i32 = arith.constant 0 : i32
    %0 = arith.cmpi eq, %arg1, %c0_i32 : i32
    %1 = arith.extui %0 : i1 to i32
    %c0_i32_0 = arith.constant 0 : i32
    %2 = arith.cmpi ne, %1, %c0_i32_0 : i32
    scf.if %2 {
      %cst = arith.constant 0.000000e+00 : f32
      %16 = vector.broadcast %cst : f32 to vector<8x64xf32>
      %c0_12 = arith.constant 0 : index
      %c0_13 = arith.constant 0 : index
      %17 = vector.load %arg6[%c0_12, %c0_13] : memref<8x64xf32, #tpu.memory_space<vmem>>, vector<8x64xf32>
      tpu.vector_store %arg6[%c0_12, %c0_13], %16 {strides = array<i32>} : memref<8x64xf32, #tpu.memory_space<vmem>>, vector<8x64xf32>,
    } else {
    }
    %c0 = arith.constant 0 : index
    %c0_1 = arith.constant 0 : index
    %3 = vector.load %arg2[%c0, %c0_1] : memref<8x64xf32, #tpu.memory_space<vmem>>, vector<8x64xf32>
    %c0_2 = arith.constant 0 : index
    %c0_3 = arith.constant 0 : index
    %4 = vector.load %arg3[%c0_2, %c0_3] : memref<8x64xf32, #tpu.memory_space<vmem>>, vector<8x64xf32>
    %5 = arith.subf %3, %4 : vector<8x64xf32>
    %c0_4 = arith.constant 0 : index
    %c0_5 = arith.constant 0 : index
    %6 = vector.load %arg6[%c0_4, %c0_5] : memref<8x64xf32, #tpu.memory_space<vmem>>, vector<8x64xf32>
    %c0_6 = arith.constant 0 : index
    %c0_7 = arith.constant 0 : index
    %7 = vector.load %arg4[%c0_6, %c0_7] : memref<8x1xf32, #tpu.memory_space<vmem>>, vector<8x1xf32>
    %8 = arith.mulf %5, %5 : vector<8x64xf32>
    %9 = vector.broadcast %7 : vector<8x1xf32> to vector<8x64xf32>
    %10 = arith.mulf %9, %8 : vector<8x64xf32>
    %11 = arith.addf %6, %10 : vector<8x64xf32>
    %c0_8 = arith.constant 0 : index
    %c0_9 = arith.constant 0 : index
    %12 = vector.load %arg6[%c0_8, %c0_9] : memref<8x64xf32, #tpu.memory_space<vmem>>, vector<8x64xf32>
    tpu.vector_store %arg6[%c0_8, %c0_9], %11 {strides = array<i32>} : memref<8x64xf32, #tpu.memory_space<vmem>>, vector<8x64xf32>,
    %c0_i32_10 = arith.constant 0 : i32
    %13 = arith.cmpi eq, %arg1, %c0_i32_10 : i32
    %14 = arith.extui %13 : i1 to i32
    %c0_i32_11 = arith.constant 0 : i32
    %15 = arith.cmpi ne, %14, %c0_i32_11 : i32
    scf.if %15 {
      %c0_12 = arith.constant 0 : index
      %c0_13 = arith.constant 0 : index
      %16 = vector.load %arg6[%c0_12, %c0_13] : memref<8x64xf32, #tpu.memory_space<vmem>>, vector<8x64xf32>
      %17 = vector.shape_cast %16 : vector<8x64xf32> to vector<1x8x64xf32>
      %cst = arith.constant dense<0.000000e+00> : vector<1xf32>
      %18 = vector.multi_reduction <add>, %17, %cst [1, 2] : vector<1x8x64xf32> to vector<1xf32>
      %19 = vector.shape_cast %18 : vector<1xf32> to vector<1x1x1xf32>
      %20 = vector.extract %19[0, 0, 0] : f32 from vector<1x1x1xf32>
      %21 = tpu.iota {dimensions = array<i32: 1>} : vector<1x8x128xi32>
      %22 = tpu.iota {dimensions = array<i32: 2>} : vector<1x8x128xi32>
      %c0_i32_14 = arith.constant 0 : i32
      %23 = vector.broadcast %c0_i32_14 : i32 to vector<1x8x128xi32>
      %24 = arith.cmpi eq, %21, %23 : vector<1x8x128xi32>
      %c0_i32_15 = arith.constant 0 : i32
      %25 = vector.broadcast %c0_i32_15 : i32 to vector<1x8x128xi32>
      %26 = arith.cmpi eq, %22, %25 : vector<1x8x128xi32>
      %27 = arith.andi %24, %26 : vector<1x8x128xi1>
      %cst_16 = arith.constant 0.000000e+00 : f32
      %28 = vector.broadcast %20 : f32 to vector<1x8x128xf32>
      %29 = vector.broadcast %cst_16 : f32 to vector<1x8x128xf32>
      %30 = arith.select %27, %28, %29 : vector<1x8x128xi1>, vector<1x8x128xf32>
      %c0_17 = arith.constant 0 : index
      %c0_18 = arith.constant 0 : index
      %c0_19 = arith.constant 0 : index
      %31 = vector.load %arg5[%c0_17, %c0_18, %c0_19] : memref<1x8x128xf32, #tpu.memory_space<vmem>>, vector<1x8x128xf32>
      tpu.vector_store %arg5[%c0_17, %c0_18, %c0_19], %30 {strides = array<i32>} : memref<1x8x128xf32, #tpu.memory_space<vmem>>, vector<1x8x128xf32>,
    } else {
    }
    return
  }
  func.func @transform_0(%arg0: i32, %arg1: i32) -> (i32, i32) {
    %c0_i32 = arith.constant 0 : i32
    return %arg0, %arg1 : i32, i32
  }
  func.func @transform_1(%arg0: i32, %arg1: i32) -> (i32, i32) {
    %c0_i32 = arith.constant 0 : i32
    return %arg0, %arg1 : i32, i32
  }
  func.func @transform_2(%arg0: i32, %arg1: i32) -> (i32, i32) {
    %c0_i32 = arith.constant 0 : i32
    %c0_i32_0 = arith.constant 0 : i32
    return %arg0, %c0_i32 : i32, i32
  }
  func.func @transform_3(%arg0: i32, %arg1: i32) -> (i32, i32, i32) {
    %c0_i32 = arith.constant 0 : i32
    %c0_i32_0 = arith.constant 0 : i32
    %c0_i32_1 = arith.constant 0 : i32
    return %arg0, %c0_i32, %c0_i32_0 : i32, i32, i32
  }
}

</mosaic_0001>

<llo_original>
// kernel: tpu_custom_call.1
$region0: #{tpu_custom_call.1}
  #allocation0 [shape = 'u32[]', space=smem, size = 0x4, offset = 0x4, fixed_abs, tag = 'smem constant byte address 0x4 - core index']
  #allocation1 [shape = 'u32[144,128]{1,0:T(1,128)}', space=vmem, size = 0x12000, scoped, tag = 'internal scratch']
  #allocation2 [shape = 'f32[8,64]{1,0:T(8,128)}', space=vmem, size = 0x1000, scoped, tag = 'scratch operand']
  %s0 = inlined_call_operand.vmem [shape: f32[8,64], index: 0, kind: input, shape index: {}]
  %s1 = inlined_call_operand.hbm [shape: f32[8,64], index: 1, kind: input, shape index: {}]
  %s2 = inlined_call_operand.vmem [shape: f32[8,1], index: 2, kind: input, shape index: {}]
  %s3 = inlined_call_operand.hbm [shape: f32[1,8,128], index: 3, kind: output, shape index: {}]
  %s4 = sld [smem:[#allocation0]]
  $region34: #{tpu_custom_call.1} parent=0
    _
  %s6 = ssub.s32 1, %s4
  %s7 = scalar_select 0, %s6, %s4
  $region1: #{tpu_custom_call.1} parent=0
    #allocation3 [shape = 'u8[4096]{0}', space=vmem, size = 0x1000, scoped, tag = 'input window, operand 1, single buffered']
    #allocation4 [shape = 's32[1]{0}', space=sflag, size = 0x4, scoped, tag = 'scoped memory for tpu_custom_call.1']
    #allocation5 [shape = 's32[1]{0}', space=sflag, size = 0x4, scoped, tag = 'scoped memory for tpu_custom_call.1']
    #allocation6 [shape = 'u8[4096]{0}', space=vmem, size = 0x1000, scoped, tag = 'output window, operand 0, single buffered']
    %8 = vsyncpa [#allocation4], 0
    %9 = vsyncpa [#allocation5], 0
    // Predicated region
    $region2: #{tpu_custom_call.1} parent=1 // pred_check
      _
    $region3: #{tpu_custom_call.1} parent=1 // pred_check_branch
      %11 = sbr.rel (0) target = $region5
    $region4: #{tpu_custom_call.1} parent=1 // pred_region
      _
    $region5: #{tpu_custom_call.1} parent=1 // pred_fallthru
      _
    // Predicated region
    $region6: #{tpu_custom_call.1} parent=1 // pred_check
      _
    $region7: #{tpu_custom_call.1} parent=1 // pred_check_branch
      %13 = sbr.rel (0) target = $region9
    $region8: #{tpu_custom_call.1} parent=1 // pred_region
      %s15 = ssub.s32 128, 128
      %16 = vsyncadd [#allocation4], %s15
      %s18 = sshll.u32 [#allocation3], 4
      %s19 = int_to_ptr.vmem [resolvable:$true] %s18
      %21 = dma.hbm_to_vmem [thread:$0]  %s1, 128, %s19, [#allocation4]
    $region9: #{tpu_custom_call.1} parent=1 // pred_fallthru
      _
    // Predicated region
    $region10: #{tpu_custom_call.1} parent=1 // pred_check
      _
    $region11: #{tpu_custom_call.1} parent=1 // pred_check_branch
      %23 = sbr.rel (0) target = $region13
    $region12: #{tpu_custom_call.1} parent=1 // pred_region
      _
    $region13: #{tpu_custom_call.1} parent=1 // pred_fallthru
      _
    // Predicated region
    $region14: #{tpu_custom_call.1} parent=1 // pred_check
      _
    $region15: #{tpu_custom_call.1} parent=1 // pred_check_branch
      %25 = sbr.rel (0) target = $region17
    $region16: #{tpu_custom_call.1} parent=1 // pred_region
      %26 = dma.done [#allocation4], 128
    $region17: #{tpu_custom_call.1} parent=1 // pred_fallthru
      _
    %p27 = scmp.eq.s32.totalorder 0, 0
    // Predicated region
    $region18: #{tpu_custom_call.1} parent=1 // pred_check
      %p28 = pneg %p27
    $region19: #{tpu_custom_call.1} parent=1 // pred_check_branch
      %30 = sbr.rel (%p28) target = $region21
    $region20: #{tpu_custom_call.1} parent=1 // pred_region
      %vm31 = vcmask 523264
      %32 = vst.msk [vmem:[#allocation2] sm:$0xff] %vm31, 0.0
    $region21: #{tpu_custom_call.1} parent=1 // pred_fallthru
      _
    %v33 = vld [vmem:[%s0] sm:$0xff]
    %v34 = vld [vmem:[#allocation3] sm:$0xff]
    %v35 = vsub.f32 %v33, %v34
    %v36 = vld [vmem:[#allocation2] sm:$0xff]
    %v37 = vld [vmem:[%s2] sm:$0xff]
    %v38 = vmul.f32 %v35, %v35
    %40 = vset.pattern.permute.xlu0 0
    %41 = vperm.xlu0 %40, %v37
    %v42 = vpop.permute.xlu0 %41
    %v44 = vmul.f32 %v42, %v38
    %v45 = vadd.f32 %v36, %v44
    %vm46 = vcmask 523264
    %47 = vst.msk [vmem:[#allocation2] sm:$0xff] %vm46, %v45
    // Predicated region
    $region22: #{tpu_custom_call.1} parent=1 // pred_check
      %p48 = pneg %p27
    $region23: #{tpu_custom_call.1} parent=1 // pred_check_branch
      %50 = sbr.rel (%p48) target = $region25
    $region24: #{tpu_custom_call.1} parent=1 // pred_region
      %v51 = vld [vmem:[#allocation2] sm:$0xff]
      %v52 = vsel %vm46, %v51, 0.0
      %53 = vadd.xlane.f32.xlu0 %v52
      %v54 = vpop.xlane.xlu0 %53
      %v55 = vrot.slane %v54, 4
      %v56 = vadd.f32 %v54, %v55
      %v57 = vrot.slane %v56, 2
      %v58 = vadd.f32 %v56, %v57
      %v59 = vrot.slane %v58, 1
      %v60 = vadd.f32 %v58, %v59
      %s61 = vtos %v60
      %v62 = vlaneseq
      %v63 = vshrl.u32 %v62, 7
      %v64 = vlaneseq
      %v65 = vand.u32 %v64, 127
      %vm66 = vcmp.eq.s32.totalorder %v63, 0
      %vm67 = vcmp.eq.s32.totalorder %v65, 0
      %vm68 = vmand %vm66, %vm67
      %v69 = vstv %s61
      %v70 = vsel %vm68, %v69, 0.0
      %71 = vst [vmem:[#allocation6] sm:$0xff] %v70
    $region25: #{tpu_custom_call.1} parent=1 // pred_fallthru
      _
    // Predicated region
    $region26: #{tpu_custom_call.1} parent=1 // pred_check
      _
    $region27: #{tpu_custom_call.1} parent=1 // pred_check_branch
      %73 = sbr.rel (0) target = $region29
    $region28: #{tpu_custom_call.1} parent=1 // pred_region
      %s75 = ssub.s32 128, 128
      %76 = vsyncadd [#allocation5], %s75
      %s78 = sshll.u32 [#allocation6], 4
      %s79 = int_to_ptr.vmem [resolvable:$true] %s78
      %81 = dma.vmem_to_hbm [thread:$0]  %s79, 128, %s3, [#allocation5]
    $region29: #{tpu_custom_call.1} parent=1 // pred_fallthru
      _
    // Predicated region
    $region30: #{tpu_custom_call.1} parent=1 // pred_check
      _
    $region31: #{tpu_custom_call.1} parent=1 // pred_check_branch
      %83 = sbr.rel (0) target = $region33
    $region32: #{tpu_custom_call.1} parent=1 // pred_region
      %84 = dma.done [#allocation5], 128
    $region33: #{tpu_custom_call.1} parent=1 // pred_fallthru
      _
    %85 = vsyncpa [#allocation4], 1
    %86 = vsyncpa [#allocation5], 1

</llo_original>
